<compile_context>
chip_gen: v5e
topology: v5e:2x2
jax: 0.10.0
libtpu: 0.0.40
codegen_flags: <defaults>
</compile_context>

<pallas_src>
import jax
import jax.numpy as jnp
from jax.experimental import pallas as pl
from jax.experimental.pallas import tpu as pltpu


_GROUP = 32      # original rows packed per lane-dense X2 row (32 * 4 = 128 lanes)
_ROW_CAP = 4096  # X2 rows per block: 4096 * 512 B = 2 MiB per input buffer


def _round_up(v, m):
    return ((v + m - 1) // m) * m


def _grouped_dot_kernel(a_ref, x_ref, o_ref):
    # a_ref: (128, 128) f32 -- A[4*j + c, j] = w_eff[c] for j < 32, zero elsewhere
    # x_ref: (r, 128)   f32 -- 32 original rows per VMEM row, features interleaved
    # o_ref: (r, 32)    f32 -- one result per original row
    res = jnp.dot(x_ref[...], a_ref[...], preferred_element_type=jnp.float32)
    o_ref[...] = res[:, :_GROUP]


def _pick_block_rows(n32, requested):
    if n32 <= 8:
        return n32  # full second-minor extent (allowed by the (8,128) rule)
    if requested is None:
        requested = _ROW_CAP
    # Multiple of 8, capped so the grid has >=2 steps (feeds both TCs on v7x).
    r = min(_round_up(requested, 8), _round_up(pl.cdiv(n32, 2), 8))
    return max(8, r)


def my_list_dense(x, params, *, block_rows=None):
    """Pallas equivalent of MyListDense.forward: x -> x @ W0 @ W1 @ W2 @ W3."""
    n, k = x.shape
    assert k == 4, "MyListDense expects (N, 4) input"

    # Fold the tiny weight chain once (wrapper-side, negligible).
    w_eff = params[0].astype(jnp.float32)
    for w in params[1:]:
        w_eff = w_eff @ w.astype(jnp.float32)          # -> (4, 1)
    w_eff = w_eff.reshape(4)
    # Grouped-dot matrix: column j picks interleaved lanes 4j..4j+3 and dots
    # them with w_eff; padded to 128 columns to keep the matmul MXU-native.
    a_mat = jnp.kron(jnp.eye(_GROUP, dtype=jnp.float32), w_eff.reshape(4, 1))  # (128, 32)
    a_mat = jnp.pad(a_mat, ((0, 0), (0, 128 - _GROUP)))                        # (128, 128)

    x = x.astype(jnp.float32)
    n_pad = _round_up(n, _GROUP)
    if n_pad != n:
        # TODO(synk): this <=31-row tail pad costs one extra HBM pass over x;
        # callers with n % 32 == 0 hit the pure zero-copy bitcast path.
        x = jnp.pad(x, ((0, n_pad - n), (0, 0)))
    n32 = n_pad // _GROUP
    x2 = x.reshape(n32, 4 * _GROUP)     # free row-major bitcast -> lane-dense rows

    r = _pick_block_rows(n32, block_rows)
    grid = (pl.cdiv(n32, r),)

    out = pl.pallas_call(
        _grouped_dot_kernel,
        out_shape=jax.ShapeDtypeStruct((n32, _GROUP), jnp.float32),
        grid_spec=pltpu.PrefetchScalarGridSpec(
            num_scalar_prefetch=0,
            grid=grid,
            in_specs=[
                pl.BlockSpec((128, 128), lambda i: (0, 0)),   # constant grouped-dot matrix
                pl.BlockSpec((r, 128), lambda i: (i, 0)),     # lane-dense x tile
            ],
            out_specs=pl.BlockSpec((r, _GROUP), lambda i: (i, 0)),
        ),
        compiler_params=pltpu.CompilerParams(
            dimension_semantics=("parallel",),
        ),
        cost_estimate=pl.CostEstimate(
            flops=2 * n32 * 128 * 128,
            transcendentals=0,
            bytes_accessed=n_pad * 16 + n_pad * 4 + 128 * 128 * 4,
        ),
    )(a_mat, x2)

    y = out.reshape(n_pad, 1)           # free row-major bitcast
    if n_pad != n:
        y = y[:n]
    return y


def init_params(key):
    """Deterministic stand-in for the torch.randn parameters."""
    k0, k1, k2, k3 = jax.random.split(key, 4)
    return (
        jax.random.normal(k0, (4, 4), jnp.float32),
        jax.random.normal(k1, (4, 4), jnp.float32),
        jax.random.normal(k2, (4, 4), jnp.float32),
        jax.random.normal(k3, (4, 1), jnp.float32),
    )


def _reference(x, params):
    ref = x.astype(jnp.float32)
    for w in params:                    # original left-to-right torch.mm chain
        ref = ref @ w.astype(jnp.float32)
    return ref


def _max_err(out, ref):
    return float(jnp.max(jnp.abs(out - ref)))


if __name__ == "__main__":
    key = jax.random.PRNGKey(0)
    kx, kp = jax.random.split(key)
    params = init_params(kp)

    # Main case: n % 32 == 0 (zero-copy bitcast path) with a small block_rows so
    # the 4-step grid exercises the index maps / pipelining.
    n_main = 1024
    x_main = jax.random.normal(kx, (n_main, 4), jnp.float32)
    out_main = jax.block_until_ready(my_list_dense(x_main, params, block_rows=8))
    ref_main = _reference(x_main, params)
    assert out_main.shape == (n_main, 1)
    scale = float(jnp.max(jnp.abs(ref_main)))
    # Folding the weight chain and the MXU's f32 summation order differ slightly
    # from the left-to-right torch.mm chain; layout/indexing bugs would produce
    # O(scale) errors, so a 2% bound still catches real failures.
    assert _max_err(out_main, ref_main) <= 2e-2 * scale + 1e-3

    # Tail case: n % 32 != 0 exercises the pad + output-slice fallback path.
    n_tail = 100
    x_tail = jax.random.normal(jax.random.fold_in(kx, 1), (n_tail, 4), jnp.float32)
    out_tail = jax.block_until_ready(my_list_dense(x_tail, params))
    ref_tail = _reference(x_tail, params)
    assert out_tail.shape == (n_tail, 1)
    assert _max_err(out_tail, ref_tail) <= 2e-2 * scale + 1e-3

    print("KERNEL_OK")
</pallas_src>

<mosaic_0001>
module attributes {stable_mosaic.version = 11 : i64} {
  func.func @_grouped_dot_kernel(%arg0: i32, %arg1: memref<128x128xf32, #tpu.memory_space<vmem>>, %arg2: memref<8x128xf32, #tpu.memory_space<vmem>>, %arg3: memref<8x32xf32, #tpu.memory_space<vmem>>) attributes {dimension_semantics = [#tpu.dimension_semantics<parallel>], iteration_bounds = array<i64: 4>, scalar_prefetch = 0 : i64, scratch_operands = 0 : i64, tpu.core_type = #tpu.core_type<tc>, window_params = [{pipeline_mode = #tpu.pipeline_mode<synchronous>, transform_indices = @transform_0, window_bounds = array<i64: 128, 128>}, {transform_indices = @transform_1, window_bounds = array<i64: 8, 128>}, {transform_indices = @transform_2, window_bounds = array<i64: 8, 32>}]} {
    %c0 = arith.constant 0 : index
    %c0_0 = arith.constant 0 : index
    %0 = vector.load %arg2[%c0, %c0_0] : memref<8x128xf32, #tpu.memory_space<vmem>>, vector<8x128xf32>
    %c0_1 = arith.constant 0 : index
    %c0_2 = arith.constant 0 : index
    %1 = vector.load %arg1[%c0_1, %c0_2] : memref<128x128xf32, #tpu.memory_space<vmem>>, vector<128x128xf32>
    %cst = arith.constant dense<0.000000e+00> : vector<8x128xf32>
    %2 = tpu.matmul %0, %1, %cst {dimension_numbers = #tpu.dot_dimension_numbers<[1], [0], [0], [1], [0, 0, 1, 1], [], []>} : vector<8x128xf32>, vector<128x128xf32>, vector<8x128xf32> -> vector<8x128xf32>
    %3 = vector.extract_strided_slice %2 {offsets = [0, 0], sizes = [8, 32], strides = [1, 1]} : vector<8x128xf32> to vector<8x32xf32>
    %c0_3 = arith.constant 0 : index
    %c0_4 = arith.constant 0 : index
    %4 = vector.load %arg3[%c0_3, %c0_4] : memref<8x32xf32, #tpu.memory_space<vmem>>, vector<8x32xf32>
    tpu.vector_store %arg3[%c0_3, %c0_4], %3 {strides = array<i32>} : memref<8x32xf32, #tpu.memory_space<vmem>>, vector<8x32xf32>,
    return
  }
  func.func @transform_0(%arg0: i32) -> (i32, i32) {
    %c0_i32 = arith.constant 0 : i32
    %c0_i32_0 = arith.constant 0 : i32
    %c0_i32_1 = arith.constant 0 : i32
    return %c0_i32, %c0_i32_0 : i32, i32
  }
  func.func @transform_1(%arg0: i32) -> (i32, i32) {
    %c0_i32 = arith.constant 0 : i32
    %c0_i32_0 = arith.constant 0 : i32
    return %arg0, %c0_i32 : i32, i32
  }
  func.func @transform_2(%arg0: i32) -> (i32, i32) {
    %c0_i32 = arith.constant 0 : i32
    %c0_i32_0 = arith.constant 0 : i32
    return %arg0, %c0_i32 : i32, i32
  }
}

</mosaic_0001>

<llo_original>
// kernel: tpu_custom_call.1
$region0: #{tpu_custom_call.1}
  #allocation0 [shape = 'u32[]', space=smem, size = 0x4, offset = 0x4, fixed_abs, tag = 'smem constant byte address 0x4 - core index']
  #allocation1 [shape = 'u32[72,128]{1,0:T(1,128)}', space=vmem, size = 0x9000, scoped, tag = 'internal scratch']
  %s0 = inlined_call_operand.hbm [shape: f32[128,128], index: 0, kind: input, shape index: {}]
  %s1 = inlined_call_operand.hbm [shape: f32[32,128], index: 1, kind: input, shape index: {}]
  %s2 = inlined_call_operand.hbm [shape: f32[32,32], index: 2, kind: output, shape index: {}]
  %s3 = sld [smem:[#allocation0]]
  $region49: #{tpu_custom_call.1} parent=0
    _
  %s5 = ssub.s32 1, %s3
  %s6 = scalar_select 0, %s5, %s3
  $region1: #{tpu_custom_call.1} parent=0
    #allocation2 [shape = 'u8[65536]{0}', space=vmem, size = 0x10000, scoped, tag = 'input window, operand 0, single buffered']
    #allocation3 [shape = 's32[2]{0}', space=sflag, size = 0x8, scoped, tag = 'scoped memory for tpu_custom_call.1']
    #allocation4 [shape = 's32[2]{0}', space=sflag, size = 0x8, scoped, tag = 'scoped memory for tpu_custom_call.1']
    #allocation5 [shape = 'u8[8192]{0}', space=vmem, size = 0x2000, scoped, tag = 'input window, operand 1']
    #allocation6 [shape = 's32[2]{0}', space=sflag, size = 0x8, scoped, tag = 'scoped memory for tpu_custom_call.1']
    #allocation7 [shape = 'u8[8192]{0}', space=vmem, size = 0x2000, scoped, tag = 'output window, operand 0']
    %7 = vsyncpa [#allocation3], 0
    %8 = vsyncpa [#allocation6], 0
    %s9 = scalar_lea.sflag [#allocation6], 1
    %10 = vsyncpa %s9, 0
    %11 = vsyncpa [#allocation4], 0
    %s12 = scalar_lea.sflag [#allocation4], 1
    %13 = vsyncpa %s12, 0
    loop: start=0, step=1, limit=6
    $region2: #{tpu_custom_call.1} parent=1 // loop_pre_header
      _
    $region3: #{tpu_custom_call.1} parent=1 // loop_header
      %s15 = sphi 0, %s19
      %p16 = scmp.ge.s32.totalorder %s15, 6
      %s23 = sphi 0, %s23
      %s25 = sphi 0, %s23
      %s26 = sphi 0, %s25
      %s40 = sphi 0, %s26
      %s46 = sphi 0, %s48
      %s49 = sphi 0, %s46
      %s50 = sphi 0, %s49
      %s66 = sphi 0, %s50
      %s72 = sphi 0, %s74
      %s75 = sphi 0, %s72
      %s76 = sphi 0, %s75
      %s92 = sphi 0, %s76
    $region4: #{tpu_custom_call.1} parent=1 // loop_header_branch
      %18 = sbr.rel (%p16) target = $region8
    $region5: #{tpu_custom_call.1} parent=1 // loop_body
      %s20 = ssub.s32 %s15, 1
      %s21 = ssub.s32 %s15, 2
      %s22 = sadd.s32 %s15, 1
      %s24 = sadd.s32 %s23, 1
      %p27 = scmp.eq.s32.totalorder %s15, 3
      %p28 = scmp.ne.s32.totalorder %s23, %s25
      %p29 = scmp.eq.s32.totalorder %s15, 0
      %p30 = por %p28, %p29
      %p31 = scmp.ne.s32.totalorder %s23, %s25
      %p32 = scmp.eq.s32.totalorder %s20, 3
      %p33 = por %p31, %p32
      %p34 = scmp.ne.s32.totalorder %s25, %s26
      %p35 = scmp.eq.s32.totalorder %s20, 0
      %p36 = por %p34, %p35
      %p37 = scmp.ne.s32.totalorder %s25, %s26
      %p38 = scmp.eq.s32.totalorder %s21, 3
      %p39 = por %p37, %p38
      %p41 = scmp.ne.s32.totalorder %s26, %s40
      %p42 = scmp.eq.s32.totalorder %s21, 0
      %p43 = por %p41, %p42
      %s44 = ssub.s32 %s15, %s22
      %p45 = scmp.eq.s32.totalorder %s44, 0
      %s47 = sadd.s32 %s46, 1
      %s48 = scalar_select %p45, %s46, %s47
      %p51 = pneg %p45
      %p52 = scmp.eq.s32.totalorder %s15, 3
      %p53 = por %p51, %p52
      %p54 = scmp.ne.s32.totalorder %s46, %s49
      %p55 = scmp.eq.s32.totalorder %s15, 0
      %p56 = por %p54, %p55
      %p57 = scmp.ne.s32.totalorder %s46, %s49
      %p58 = scmp.eq.s32.totalorder %s20, 3
      %p59 = por %p57, %p58
      %p60 = scmp.ne.s32.totalorder %s49, %s50
      %p61 = scmp.eq.s32.totalorder %s20, 0
      %p62 = por %p60, %p61
      %p63 = scmp.ne.s32.totalorder %s49, %s50
      %p64 = scmp.eq.s32.totalorder %s21, 3
      %p65 = por %p63, %p64
      %p67 = scmp.ne.s32.totalorder %s50, %s66
      %p68 = scmp.eq.s32.totalorder %s21, 0
      %p69 = por %p67, %p68
      %s70 = ssub.s32 %s15, %s22
      %p71 = scmp.eq.s32.totalorder %s70, 0
      %s73 = sadd.s32 %s72, 1
      %s74 = scalar_select %p71, %s72, %s73
      %p77 = pneg %p71
      %p78 = scmp.eq.s32.totalorder %s15, 3
      %p79 = por %p77, %p78
      %p80 = scmp.ne.s32.totalorder %s72, %s75
      %p81 = scmp.eq.s32.totalorder %s15, 0
      %p82 = por %p80, %p81
      %p83 = scmp.ne.s32.totalorder %s72, %s75
      %p84 = scmp.eq.s32.totalorder %s20, 3
      %p85 = por %p83, %p84
      %p86 = scmp.ne.s32.totalorder %s75, %s76
      %p87 = scmp.eq.s32.totalorder %s20, 0
      %p88 = por %p86, %p87
      %p89 = scmp.ne.s32.totalorder %s75, %s76
      %p90 = scmp.eq.s32.totalorder %s21, 3
      %p91 = por %p89, %p90
      %p93 = scmp.ne.s32.totalorder %s76, %s92
      %p94 = scmp.eq.s32.totalorder %s21, 0
      %p95 = por %p93, %p94
      %p96 = scmp.le.s32.totalorder 1, %s15
      %p97 = scmp.lt.s32.totalorder %s15, 5
      %p98 = pnand %p96, %p97
      %p99 = pneg %p98
      // Predicated region
      $region9: #{tpu_custom_call.1} parent=5 // pred_check
        _
      $region10: #{tpu_custom_call.1} parent=5 // pred_check_branch
        %101 = sbr.rel (%p98) target = $region12
      $region11: #{tpu_custom_call.1} parent=5 // pred_region
        %s102 = ssub.s32 %s15, 1
        // Predicated region
        $region13: #{tpu_custom_call.1} parent=11 // pred_check
          %p103 = pneg %p36
        $region14: #{tpu_custom_call.1} parent=11 // pred_check_branch
          %105 = sbr.rel (%p103) target = $region16
        $region15: #{tpu_custom_call.1} parent=11 // pred_region
          %107 = vsyncadd [#allocation3], 0
          %s108 = sshll.u32 %s0, 4
          %s109 = int_to_ptr.hbm [resolvable:$true] %s108
          %s110 = sshll.u32 [#allocation2], 4
          %s111 = int_to_ptr.vmem [resolvable:$true] %s110
          %116 = dma.hbm_to_vmem [thread:$0]  %s109, 2048, %s111, [#allocation3], 128, 128, 8
        $region16: #{tpu_custom_call.1} parent=11 // pred_fallthru
          _
      $region12: #{tpu_custom_call.1} parent=5 // pred_fallthru
        _
      %p117 = scmp.lt.s32.totalorder %s15, 4
      // Predicated region
      $region17: #{tpu_custom_call.1} parent=5 // pred_check
        %p118 = pneg %p117
      $region18: #{tpu_custom_call.1} parent=5 // pred_check_branch
        %120 = sbr.rel (%p118) target = $region20
      $region19: #{tpu_custom_call.1} parent=5 // pred_region
        // Predicated region
        $region21: #{tpu_custom_call.1} parent=19 // pred_check
          %p121 = pneg %p56
        $region22: #{tpu_custom_call.1} parent=19 // pred_check_branch
          %123 = sbr.rel (%p121) target = $region24
        $region23: #{tpu_custom_call.1} parent=19 // pred_region
          %s124 = sand.u32 %s46, 1
          %s125 = scalar_lea.sflag [#allocation6], %s124
          %s126 = sand.u32 %s46, 1
          %s127 = smul.addr %s126, 8
          %s128 = scalar_lea.vmem [#allocation5], %s127
          %130 = vsyncadd %s125, 0
          %s131 = smul.addr %s15, 8
          %s132 = scalar_lea.hbm %s1, %s131
          %s134 = sshll.u32 %s132, 4
          %s135 = int_to_ptr.hbm [resolvable:$true] %s134
          %s136 = sshll.u32 %s128, 4
          %s137 = int_to_ptr.vmem [resolvable:$true] %s136
          %139 = dma.hbm_to_vmem [thread:$0]  %s135, 128, %s137, %s125
        $region24: #{tpu_custom_call.1} parent=19 // pred_fallthru
          _
      $region20: #{tpu_custom_call.1} parent=5 // pred_fallthru
        _
      %p140 = scmp.le.s32.totalorder 1, %s15
      %p141 = scmp.lt.s32.totalorder %s15, 5
      %p142 = pnand %p140, %p141
      %p143 = pneg %p142
      // Predicated region
      $region25: #{tpu_custom_call.1} parent=5 // pred_check
        _
      $region26: #{tpu_custom_call.1} parent=5 // pred_check_branch
        %145 = sbr.rel (%p142) target = $region28
      $region27: #{tpu_custom_call.1} parent=5 // pred_region
        %s146 = ssub.s32 %s15, 1
        // Predicated region
        $region29: #{tpu_custom_call.1} parent=27 // pred_check
          %p147 = pneg %p36
        $region30: #{tpu_custom_call.1} parent=27 // pred_check_branch
          %149 = sbr.rel (%p147) target = $region32
        $region31: #{tpu_custom_call.1} parent=27 // pred_region
          %151 = dma.done [#allocation3], 2048
        $region32: #{tpu_custom_call.1} parent=27 // pred_fallthru
          _
        %s152 = sand.u32 %s49, 1
        %s153 = scalar_lea.sflag [#allocation6], %s152
        %s154 = sand.u32 %s49, 1
        %s155 = smul.addr %s154, 8
        %s156 = scalar_lea.vmem [#allocation5], %s155
        // Predicated region
        $region33: #{tpu_custom_call.1} parent=27 // pred_check
          %p157 = pneg %p62
        $region34: #{tpu_custom_call.1} parent=27 // pred_check_branch
          %159 = sbr.rel (%p157) target = $region36
        $region35: #{tpu_custom_call.1} parent=27 // pred_region
          %161 = dma.done %s153, 128
        $region36: #{tpu_custom_call.1} parent=27 // pred_fallthru
          _
        %p162 = pneg %p36
        %p163 = pneg %p33
        %s164 = sand.u32 %s49, 1
        %s165 = scalar_lea.sflag [#allocation6], %s164
        %s166 = sand.u32 %s49, 1
        %s167 = smul.addr %s166, 8
        %s168 = scalar_lea.vmem [#allocation5], %s167
        %p169 = pneg %p62
        %p170 = pneg %p59
        %p171 = pneg %p88
        %p172 = pneg %p85
        %s173 = sand.u32 %s75, 1
        %s174 = scalar_lea.sflag [#allocation4], %s173
        %s175 = sand.u32 %s75, 1
        %s176 = smul.addr %s175, 8
        %s177 = scalar_lea.vmem [#allocation7], %s176
        %v178 = vld [vmem:[%s156] sm:$0xff]
        %v179 = vld [vmem:[#allocation2] sm:$0xff]
        %v180 = vld [vmem:[#allocation2 + $0x8] sm:$0xff]
        %v181 = vld [vmem:[#allocation2 + $0x10] sm:$0xff]
        %v182 = vld [vmem:[#allocation2 + $0x18] sm:$0xff]
        %v183 = vld [vmem:[#allocation2 + $0x20] sm:$0xff]
        %v184 = vld [vmem:[#allocation2 + $0x28] sm:$0xff]
        %v185 = vld [vmem:[#allocation2 + $0x30] sm:$0xff]
        %v186 = vld [vmem:[#allocation2 + $0x38] sm:$0xff]
        %v187 = vld [vmem:[#allocation2 + $0x40] sm:$0xff]
        %v188 = vld [vmem:[#allocation2 + $0x48] sm:$0xff]
        %v189 = vld [vmem:[#allocation2 + $0x50] sm:$0xff]
        %v190 = vld [vmem:[#allocation2 + $0x58] sm:$0xff]
        %v191 = vld [vmem:[#allocation2 + $0x60] sm:$0xff]
        %v192 = vld [vmem:[#allocation2 + $0x68] sm:$0xff]
        %v193 = vld [vmem:[#allocation2 + $0x70] sm:$0xff]
        %v194 = vld [vmem:[#allocation2 + $0x78] sm:$0xff]
        %195 = vmatpush.msra.mxu0 %v194
        %196 = vmatpush.msra.mxu0 %v193
        %197 = vmatpush.msra.mxu0 %v192
        %198 = vmatpush.msra.mxu0 %v191
        %199 = vmatpush.msra.mxu0 %v190
        %200 = vmatpush.msra.mxu0 %v189
        %201 = vmatpush.msra.mxu0 %v188
        %202 = vmatpush.msra.mxu0 %v187
        %203 = vmatpush.msra.mxu0 %v186
        %204 = vmatpush.msra.mxu0 %v185
        %205 = vmatpush.msra.mxu0 %v184
        %206 = vmatpush.msra.mxu0 %v183
        %207 = vmatpush.msra.mxu0 %v182
        %208 = vmatpush.msra.mxu0 %v181
        %209 = vmatpush.msra.mxu0 %v180
        %210 = vmatpush.msra.mxu0 %v179
        %211 = vmatmul.f32.gmra.mxu0 %v178
        %v212 = vpop.f32.mrf.mxu0
        %v213 = vadd.f32 0.0, %v212
        %214 = vdwg.mxu0
        %vm215 = vcmask 261120
        %216 = vst.msk [vmem:[%s177] sm:$0xff] %vm215, %v213
        %s217 = sand.u32 %s75, 1
        %s218 = scalar_lea.sflag [#allocation4], %s217
        %s219 = sand.u32 %s75, 1
        %s220 = smul.addr %s219, 8
        %s221 = scalar_lea.vmem [#allocation7], %s220
        // Predicated region
        $region37: #{tpu_custom_call.1} parent=27 // pred_check
          %p222 = pneg %p85
        $region38: #{tpu_custom_call.1} parent=27 // pred_check_branch
          %224 = sbr.rel (%p222) target = $region40
        $region39: #{tpu_custom_call.1} parent=27 // pred_region
          %226 = vsyncadd %s218, 0
          %s227 = smul.addr %s20, 8
          %s228 = scalar_lea.hbm %s2, %s227
          %s230 = sshll.u32 %s221, 4
          %s231 = int_to_ptr.vmem [resolvable:$true] %s230
          %s232 = sshll.u32 %s228, 4
          %s233 = int_to_ptr.hbm [resolvable:$true] %s232
          %235 = dma.vmem_to_hbm [thread:$0]  %s231, 128, %s233, %s218
        $region40: #{tpu_custom_call.1} parent=27 // pred_fallthru
          _
      $region28: #{tpu_custom_call.1} parent=5 // pred_fallthru
        _
      %p236 = scmp.le.s32.totalorder 2, %s15
      // Predicated region
      $region41: #{tpu_custom_call.1} parent=5 // pred_check
        %p237 = pneg %p236
      $region42: #{tpu_custom_call.1} parent=5 // pred_check_branch
        %239 = sbr.rel (%p237) target = $region44
      $region43: #{tpu_custom_call.1} parent=5 // pred_region
        %s240 = ssub.s32 %s15, 2
        // Predicated region
        $region45: #{tpu_custom_call.1} parent=43 // pred_check
          %p241 = pneg %p91
        $region46: #{tpu_custom_call.1} parent=43 // pred_check_branch
          %243 = sbr.rel (%p241) target = $region48
        $region47: #{tpu_custom_call.1} parent=43 // pred_region
          %s244 = sand.u32 %s76, 1
          %s245 = scalar_lea.sflag [#allocation4], %s244
          %s246 = sand.u32 %s76, 1
          %s247 = smul.addr %s246, 8
          %s248 = scalar_lea.vmem [#allocation7], %s247
          %250 = dma.done %s245, 128
        $region48: #{tpu_custom_call.1} parent=43 // pred_fallthru
          _
      $region44: #{tpu_custom_call.1} parent=5 // pred_fallthru
        _
    $region6: #{tpu_custom_call.1} parent=1 // loop_footer
      %s19 = sadd.s32 1, %s15
    $region7: #{tpu_custom_call.1} parent=1 // loop_footer_branch
      %14 = sbr.rel target = $region3
    $region8: #{tpu_custom_call.1} parent=1 // loop_exit
      _
    %251 = vsyncpa [#allocation3], 1
    %s252 = scalar_lea.sflag [#allocation3], 1
    %253 = vsyncpa %s252, 1
    %254 = vsyncpa [#allocation6], 1
    %s255 = scalar_lea.sflag [#allocation6], 1
    %256 = vsyncpa %s255, 1
    %257 = vsyncpa [#allocation4], 1
    %s258 = scalar_lea.sflag [#allocation4], 1
    %259 = vsyncpa %s258, 1

</llo_original>
